<compile_context>
chip_gen: v7x
topology: tpu7x:2x2x1
jax: 0.10.0
libtpu: 0.0.40
codegen_flags: <defaults>
</compile_context>

<pallas_src>
import jax
import jax.numpy as jnp
from jax.experimental import pallas as pl
from jax.experimental.pallas import tpu as pltpu

EPS = 1e-5


def bn_relu_kernel(x_ref, gamma_ref, beta_ref, o_ref):
    # x_ref: (N, Cblk, L) with L = H*W; gamma/beta: (1, Cblk, 1)
    x = x_ref[...].astype(jnp.float32)
    inv_count = 1.0 / float(x_ref.shape[0] * x_ref.shape[2])

    # Two independent single-pass reductions (no serial mean->center->var
    # chain); x*x feeds directly into the reduction.
    sum_x = jnp.sum(x, axis=(0, 2), keepdims=True)       # (1, Cblk, 1)
    sum_xx = jnp.sum(x * x, axis=(0, 2), keepdims=True)  # (1, Cblk, 1)

    mean = sum_x * inv_count
    var = sum_xx * inv_count - mean * mean                # biased batch var (train mode)
    inv_std = jax.lax.rsqrt(var + EPS)                    # EUP slot

    # Fold affine into one per-channel scale/shift.
    scale = gamma_ref[...] * inv_std                      # (1, Cblk, 1)
    shift = beta_ref[...] - mean * scale

    # Single full-tile mul + add + max; broadcasts along lanes.
    o_ref[...] = jnp.maximum(x * scale + shift, 0.0).astype(o_ref.dtype)


def _tensorcores_per_device():
    """Best-effort TensorCores-per-JAX-device.  v5e/v6e have 1 TC per device,
    v7x has 2 (sharded via dimension_semantics='parallel').  Any detection
    failure falls back to 1 (single grid step), which is optimal on
    single-TC chips and merely skips the 2-way split on v7x."""
    try:
        dev = jax.devices()[0]
        if dev.platform != "tpu":
            return 1
        kind = (getattr(dev, "device_kind", "") or "").lower()
        if "v7" in kind:
            return 2
    except Exception:
        pass
    return 1


def _pick_cblk(C, per_channel_bytes, num_tc, vmem_budget=16 << 20):
    """Channel block size:
       1) one grid step per TensorCore if that block fits VMEM,
       2) else a single full-C block if it fits (single-TC optimum),
       3) else the largest multiple-of-8 divisor of C that fits."""
    if (num_tc > 1 and C % num_tc == 0 and (C // num_tc) % 8 == 0
            and (C // num_tc) * per_channel_bytes <= vmem_budget):
        return C // num_tc
    if C * per_channel_bytes <= vmem_budget:
        return C
    cands = [c for c in range(8, C + 1, 8)
             if C % c == 0 and c * per_channel_bytes <= vmem_budget]
    return max(cands) if cands else C


def batchnorm_relu(x_nchw, gamma, beta):
    """x_nchw: (N, C, H, W); gamma, beta: (C,).  Returns BN(train-stats)+ReLU."""
    N, C, H, W = x_nchw.shape
    L = H * W
    out_dtype = x_nchw.dtype
    in_bytes = jnp.dtype(x_nchw.dtype).itemsize
    out_bytes = jnp.dtype(out_dtype).itemsize

    # Contiguous reshapes only — no transpose round-trip, no extra HBM pass.
    x3d = x_nchw.reshape(N, C, L)
    g3d = gamma.reshape(1, C, 1).astype(jnp.float32)
    b3d = beta.reshape(1, C, 1).astype(jnp.float32)

    # Per-channel block bytes: input + output, double-buffered.
    per_c = N * L * (in_bytes + out_bytes) * 2
    num_tc = _tensorcores_per_device()
    cblk = _pick_cblk(C, per_c, num_tc)
    grid = (C // cblk,)

    # Scheduling hint: ~5 flops/element (x*x, sum, mul, add, max),
    # C rsqrts, one read + one write of the activation.
    cost = pl.CostEstimate(
        flops=5 * N * C * L,
        transcendentals=C,
        bytes_accessed=N * C * L * (in_bytes + out_bytes),
    )

    out3d = pl.pallas_call(
        bn_relu_kernel,
        out_shape=jax.ShapeDtypeStruct((N, C, L), out_dtype),
        grid=grid,
        in_specs=[
            pl.BlockSpec((N, cblk, L), lambda i: (0, i, 0)),
            pl.BlockSpec((1, cblk, 1), lambda i: (0, i, 0)),
            pl.BlockSpec((1, cblk, 1), lambda i: (0, i, 0)),
        ],
        out_specs=pl.BlockSpec((N, cblk, L), lambda i: (0, i, 0)),
        compiler_params=pltpu.CompilerParams(
            dimension_semantics=("parallel",),
        ),
        cost_estimate=cost,
    )(x3d, g3d, b3d)

    return out3d.reshape(N, C, H, W)


if __name__ == "__main__":
    key = jax.random.PRNGKey(0)
    # Shapes implied by the module: BatchNorm2d(192) on (1, 192, 14, 14)
    N, C, H, W = 1, 192, 14, 14
    x = jax.random.normal(key, (N, C, H, W), dtype=jnp.float32)

    # PyTorch BatchNorm2d default affine init: weight = 1, bias = 0
    gamma = jnp.ones((C,), dtype=jnp.float32)
    beta = jnp.zeros((C,), dtype=jnp.float32)

    # TODO(synk): running_mean/running_var (momentum=0.1, unbiased var) state
    # update is not produced; only the forward activation is computed.
    out = batchnorm_relu(x, gamma, beta)
    out = jax.block_until_ready(out)

    # lightweight sanity check against a pure-JAX reference
    mean = jnp.mean(x, axis=(0, 2, 3), keepdims=True)
    var = jnp.mean((x - mean) ** 2, axis=(0, 2, 3), keepdims=True)
    ref = jnp.maximum(
        (x - mean) * jax.lax.rsqrt(var + EPS) * gamma.reshape(1, C, 1, 1)
        + beta.reshape(1, C, 1, 1),
        0.0,
    )
    assert out.shape == (N, C, H, W)
    assert jnp.max(jnp.abs(out - ref)) < 1e-4

    print("KERNEL_OK")
</pallas_src>

<mosaic_0001>
module attributes {stable_mosaic.version = 11 : i64} {
  func.func @bn_relu_kernel(%arg0: i32, %arg1: memref<1x192x196xf32, #tpu.memory_space<vmem>>, %arg2: memref<1x192x1xf32, #tpu.memory_space<vmem>>, %arg3: memref<1x192x1xf32, #tpu.memory_space<vmem>>, %arg4: memref<1x192x196xf32, #tpu.memory_space<vmem>>) attributes {dimension_semantics = [#tpu.dimension_semantics<parallel>], iteration_bounds = array<i64: 1>, scalar_prefetch = 0 : i64, scratch_operands = 0 : i64, tpu.core_type = #tpu.core_type<tc>, window_params = [{transform_indices = @transform_0, window_bounds = array<i64: 1, 192, 196>}, {transform_indices = @transform_1, window_bounds = array<i64: 1, 192, 1>}, {transform_indices = @transform_2, window_bounds = array<i64: 1, 192, 1>}, {transform_indices = @transform_3, window_bounds = array<i64: 1, 192, 196>}]} {
    %c0 = arith.constant 0 : index
    %c0_0 = arith.constant 0 : index
    %c0_1 = arith.constant 0 : index
    %0 = vector.load %arg1[%c0, %c0_0, %c0_1] : memref<1x192x196xf32, #tpu.memory_space<vmem>>, vector<1x192x196xf32>
    %cst = arith.constant dense<0.000000e+00> : vector<192xf32>
    %1 = vector.multi_reduction <add>, %0, %cst [0, 2] : vector<1x192x196xf32> to vector<192xf32>
    %2 = vector.shape_cast %1 : vector<192xf32> to vector<1x192x1xf32>
    %3 = arith.mulf %0, %0 : vector<1x192x196xf32>
    %cst_2 = arith.constant dense<0.000000e+00> : vector<192xf32>
    %4 = vector.multi_reduction <add>, %3, %cst_2 [0, 2] : vector<1x192x196xf32> to vector<192xf32>
    %5 = vector.shape_cast %4 : vector<192xf32> to vector<1x192x1xf32>
    %cst_3 = arith.constant 0.00510204071 : f32
    %6 = vector.broadcast %cst_3 : f32 to vector<1x192x1xf32>
    %7 = arith.mulf %2, %6 : vector<1x192x1xf32>
    %cst_4 = arith.constant 0.00510204071 : f32
    %8 = vector.broadcast %cst_4 : f32 to vector<1x192x1xf32>
    %9 = arith.mulf %5, %8 : vector<1x192x1xf32>
    %10 = arith.mulf %7, %7 : vector<1x192x1xf32>
    %11 = arith.subf %9, %10 : vector<1x192x1xf32>
    %cst_5 = arith.constant 9.99999974E-6 : f32
    %12 = vector.broadcast %cst_5 : f32 to vector<1x192x1xf32>
    %13 = arith.addf %11, %12 : vector<1x192x1xf32>
    %14 = math.rsqrt %13 : vector<1x192x1xf32>
    %c0_6 = arith.constant 0 : index
    %c0_7 = arith.constant 0 : index
    %c0_8 = arith.constant 0 : index
    %15 = vector.load %arg2[%c0_6, %c0_7, %c0_8] : memref<1x192x1xf32, #tpu.memory_space<vmem>>, vector<1x192x1xf32>
    %16 = arith.mulf %15, %14 : vector<1x192x1xf32>
    %c0_9 = arith.constant 0 : index
    %c0_10 = arith.constant 0 : index
    %c0_11 = arith.constant 0 : index
    %17 = vector.load %arg3[%c0_9, %c0_10, %c0_11] : memref<1x192x1xf32, #tpu.memory_space<vmem>>, vector<1x192x1xf32>
    %18 = arith.mulf %7, %16 : vector<1x192x1xf32>
    %19 = arith.subf %17, %18 : vector<1x192x1xf32>
    %20 = vector.broadcast %16 : vector<1x192x1xf32> to vector<1x192x196xf32>
    %21 = arith.mulf %0, %20 : vector<1x192x196xf32>
    %22 = vector.broadcast %19 : vector<1x192x1xf32> to vector<1x192x196xf32>
    %23 = arith.addf %21, %22 : vector<1x192x196xf32>
    %cst_12 = arith.constant 0.000000e+00 : f32
    %24 = vector.broadcast %cst_12 : f32 to vector<1x192x196xf32>
    %25 = arith.maximumf %23, %24 : vector<1x192x196xf32>
    %c0_13 = arith.constant 0 : index
    %c0_14 = arith.constant 0 : index
    %c0_15 = arith.constant 0 : index
    %26 = vector.load %arg4[%c0_13, %c0_14, %c0_15] : memref<1x192x196xf32, #tpu.memory_space<vmem>>, vector<1x192x196xf32>
    tpu.vector_store %arg4[%c0_13, %c0_14, %c0_15], %25 {strides = array<i32>} : memref<1x192x196xf32, #tpu.memory_space<vmem>>, vector<1x192x196xf32>,
    return
  }
  func.func @transform_0(%arg0: i32) -> (i32, i32, i32) {
    %c0_i32 = arith.constant 0 : i32
    %c0_i32_0 = arith.constant 0 : i32
    %c0_i32_1 = arith.constant 0 : i32
    return %c0_i32, %arg0, %c0_i32_0 : i32, i32, i32
  }
  func.func @transform_1(%arg0: i32) -> (i32, i32, i32) {
    %c0_i32 = arith.constant 0 : i32
    %c0_i32_0 = arith.constant 0 : i32
    %c0_i32_1 = arith.constant 0 : i32
    return %c0_i32, %arg0, %c0_i32_0 : i32, i32, i32
  }
  func.func @transform_2(%arg0: i32) -> (i32, i32, i32) {
    %c0_i32 = arith.constant 0 : i32
    %c0_i32_0 = arith.constant 0 : i32
    %c0_i32_1 = arith.constant 0 : i32
    return %c0_i32, %arg0, %c0_i32_0 : i32, i32, i32
  }
  func.func @transform_3(%arg0: i32) -> (i32, i32, i32) {
    %c0_i32 = arith.constant 0 : i32
    %c0_i32_0 = arith.constant 0 : i32
    %c0_i32_1 = arith.constant 0 : i32
    return %c0_i32, %arg0, %c0_i32_0 : i32, i32, i32
  }
}

</mosaic_0001>

<llo_original>
// kernel: tpu_custom_call.1
$region0: #{tpu_custom_call.1}
  #allocation0 [shape = 'u32[]', space=smem, size = 0x4, offset = 0x4, fixed_abs, tag = 'smem constant byte address 0x4 - core index']
  #allocation1 [shape = 'u32[144,128]{1,0:T(1,128)}', space=vmem, size = 0x12000, scoped, tag = 'internal scratch']
  %s0 = inlined_call_operand.vmem [shape: f32[1,192,196], index: 0, kind: input, shape index: {}]
  %s1 = inlined_call_operand.vmem [shape: f32[1,192,1], index: 1, kind: input, shape index: {}]
  %s2 = inlined_call_operand.vmem [shape: f32[1,192,1], index: 2, kind: input, shape index: {}]
  %s3 = inlined_call_operand.hbm [shape: f32[1,192,196], index: 3, kind: output, shape index: {}]
  %s4 = sld [smem:[#allocation0]]
  $region22: #{tpu_custom_call.1} parent=0
    _
  %s6 = ssub.s32 1, %s4
  %s7 = scalar_select 0, %s6, %s4
  $region1: #{tpu_custom_call.1} parent=0
    #allocation2 [shape = 'u8[196608]{0}', space=vmem, size = 0x30000, scoped, tag = 'output window, operand 0, single buffered']
    #allocation3 [shape = 's32[1]{0}', space=sflag, size = 0x4, scoped, tag = 'scoped memory for tpu_custom_call.1']
    %8 = vsyncpa [#allocation3], 0
    // Predicated region
    $region2: #{tpu_custom_call.1} parent=1 // pred_check
      _
    $region3: #{tpu_custom_call.1} parent=1 // pred_check_branch
      %10 = sbr.rel (0) target = $region5
    $region4: #{tpu_custom_call.1} parent=1 // pred_region
      _
    $region5: #{tpu_custom_call.1} parent=1 // pred_fallthru
      _
    // Predicated region
    $region6: #{tpu_custom_call.1} parent=1 // pred_check
      _
    $region7: #{tpu_custom_call.1} parent=1 // pred_check_branch
      %12 = sbr.rel (0) target = $region9
    $region8: #{tpu_custom_call.1} parent=1 // pred_region
      _
    $region9: #{tpu_custom_call.1} parent=1 // pred_fallthru
      _
    // Predicated region
    $region10: #{tpu_custom_call.1} parent=1 // pred_check
      _
    $region11: #{tpu_custom_call.1} parent=1 // pred_check_branch
      %14 = sbr.rel (0) target = $region13
    $region12: #{tpu_custom_call.1} parent=1 // pred_region
      _
    $region13: #{tpu_custom_call.1} parent=1 // pred_fallthru
      _
    %v15 = vld [vmem:[%s0] sm:$0xff]
    %v16 = vld [vmem:[%s0 + $0x8] sm:$0xff]
    %v17 = vld [vmem:[%s0 + $0x10] sm:$0xff]
    %v18 = vld [vmem:[%s0 + $0x18] sm:$0xff]
    %v19 = vld [vmem:[%s0 + $0x20] sm:$0xff]
    %v20 = vld [vmem:[%s0 + $0x28] sm:$0xff]
    %v21 = vld [vmem:[%s0 + $0x30] sm:$0xff]
    %v22 = vld [vmem:[%s0 + $0x38] sm:$0xff]
    %v23 = vld [vmem:[%s0 + $0x40] sm:$0xff]
    %v24 = vld [vmem:[%s0 + $0x48] sm:$0xff]
    %v25 = vld [vmem:[%s0 + $0x50] sm:$0xff]
    %v26 = vld [vmem:[%s0 + $0x58] sm:$0xff]
    %v27 = vld [vmem:[%s0 + $0x60] sm:$0xff]
    %v28 = vld [vmem:[%s0 + $0x68] sm:$0xff]
    %v29 = vld [vmem:[%s0 + $0x70] sm:$0xff]
    %v30 = vld [vmem:[%s0 + $0x78] sm:$0xff]
    %v31 = vld [vmem:[%s0 + $0x80] sm:$0xff]
    %v32 = vld [vmem:[%s0 + $0x88] sm:$0xff]
    %v33 = vld [vmem:[%s0 + $0x90] sm:$0xff]
    %v34 = vld [vmem:[%s0 + $0x98] sm:$0xff]
    %v35 = vld [vmem:[%s0 + $0xa0] sm:$0xff]
    %v36 = vld [vmem:[%s0 + $0xa8] sm:$0xff]
    %v37 = vld [vmem:[%s0 + $0xb0] sm:$0xff]
    %v38 = vld [vmem:[%s0 + $0xb8] sm:$0xff]
    %v39 = vld [vmem:[%s0 + $0xc0] sm:$0xff]
    %v40 = vld [vmem:[%s0 + $0xc8] sm:$0xff]
    %v41 = vld [vmem:[%s0 + $0xd0] sm:$0xff]
    %v42 = vld [vmem:[%s0 + $0xd8] sm:$0xff]
    %v43 = vld [vmem:[%s0 + $0xe0] sm:$0xff]
    %v44 = vld [vmem:[%s0 + $0xe8] sm:$0xff]
    %v45 = vld [vmem:[%s0 + $0xf0] sm:$0xff]
    %v46 = vld [vmem:[%s0 + $0xf8] sm:$0xff]
    %v47 = vld [vmem:[%s0 + $0x100] sm:$0xff]
    %v48 = vld [vmem:[%s0 + $0x108] sm:$0xff]
    %v49 = vld [vmem:[%s0 + $0x110] sm:$0xff]
    %v50 = vld [vmem:[%s0 + $0x118] sm:$0xff]
    %v51 = vld [vmem:[%s0 + $0x120] sm:$0xff]
    %v52 = vld [vmem:[%s0 + $0x128] sm:$0xff]
    %v53 = vld [vmem:[%s0 + $0x130] sm:$0xff]
    %v54 = vld [vmem:[%s0 + $0x138] sm:$0xff]
    %v55 = vld [vmem:[%s0 + $0x140] sm:$0xff]
    %v56 = vld [vmem:[%s0 + $0x148] sm:$0xff]
    %v57 = vld [vmem:[%s0 + $0x150] sm:$0xff]
    %v58 = vld [vmem:[%s0 + $0x158] sm:$0xff]
    %v59 = vld [vmem:[%s0 + $0x160] sm:$0xff]
    %v60 = vld [vmem:[%s0 + $0x168] sm:$0xff]
    %v61 = vld [vmem:[%s0 + $0x170] sm:$0xff]
    %v62 = vld [vmem:[%s0 + $0x178] sm:$0xff]
    %vm63 = vcmask 556032
    %v64 = vsel %vm63, %v16, 0.0
    %v65 = vadd.f32 %v15, %v64
    %66 = vadd.xlane.f32.xlu0 %v65
    %v67 = vpop.xlane.xlu0 %66
    %v68 = vsel %vm63, %v18, 0.0
    %v69 = vadd.f32 %v17, %v68
    %70 = vadd.xlane.f32.xlu0 %v69
    %v71 = vpop.xlane.xlu0 %70
    %v72 = vsel %vm63, %v20, 0.0
    %v73 = vadd.f32 %v19, %v72
    %74 = vadd.xlane.f32.xlu0 %v73
    %v75 = vpop.xlane.xlu0 %74
    %v76 = vsel %vm63, %v22, 0.0
    %v77 = vadd.f32 %v21, %v76
    %78 = vadd.xlane.f32.xlu0 %v77
    %v79 = vpop.xlane.xlu0 %78
    %v80 = vsel %vm63, %v24, 0.0
    %v81 = vadd.f32 %v23, %v80
    %82 = vadd.xlane.f32.xlu0 %v81
    %v83 = vpop.xlane.xlu0 %82
    %v84 = vsel %vm63, %v26, 0.0
    %v85 = vadd.f32 %v25, %v84
    %86 = vadd.xlane.f32.xlu0 %v85
    %v87 = vpop.xlane.xlu0 %86
    %v88 = vsel %vm63, %v28, 0.0
    %v89 = vadd.f32 %v27, %v88
    %90 = vadd.xlane.f32.xlu0 %v89
    %v91 = vpop.xlane.xlu0 %90
    %v92 = vsel %vm63, %v30, 0.0
    %v93 = vadd.f32 %v29, %v92
    %94 = vadd.xlane.f32.xlu0 %v93
    %v95 = vpop.xlane.xlu0 %94
    %v96 = vsel %vm63, %v32, 0.0
    %v97 = vadd.f32 %v31, %v96
    %98 = vadd.xlane.f32.xlu0 %v97
    %v99 = vpop.xlane.xlu0 %98
    %v100 = vsel %vm63, %v34, 0.0
    %v101 = vadd.f32 %v33, %v100
    %102 = vadd.xlane.f32.xlu0 %v101
    %v103 = vpop.xlane.xlu0 %102
    %v104 = vsel %vm63, %v36, 0.0
    %v105 = vadd.f32 %v35, %v104
    %106 = vadd.xlane.f32.xlu0 %v105
    %v107 = vpop.xlane.xlu0 %106
    %v108 = vsel %vm63, %v38, 0.0
    %v109 = vadd.f32 %v37, %v108
    %110 = vadd.xlane.f32.xlu0 %v109
    %v111 = vpop.xlane.xlu0 %110
    %v112 = vsel %vm63, %v40, 0.0
    %v113 = vadd.f32 %v39, %v112
    %114 = vadd.xlane.f32.xlu0 %v113
    %v115 = vpop.xlane.xlu0 %114
    %v116 = vsel %vm63, %v42, 0.0
    %v117 = vadd.f32 %v41, %v116
    %118 = vadd.xlane.f32.xlu0 %v117
    %v119 = vpop.xlane.xlu0 %118
    %v120 = vsel %vm63, %v44, 0.0
    %v121 = vadd.f32 %v43, %v120
    %122 = vadd.xlane.f32.xlu0 %v121
    %v123 = vpop.xlane.xlu0 %122
    %v124 = vsel %vm63, %v46, 0.0
    %v125 = vadd.f32 %v45, %v124
    %126 = vadd.xlane.f32.xlu0 %v125
    %v127 = vpop.xlane.xlu0 %126
    %v128 = vsel %vm63, %v48, 0.0
    %v129 = vadd.f32 %v47, %v128
    %130 = vadd.xlane.f32.xlu0 %v129
    %v131 = vpop.xlane.xlu0 %130
    %v132 = vsel %vm63, %v50, 0.0
    %v133 = vadd.f32 %v49, %v132
    %134 = vadd.xlane.f32.xlu0 %v133
    %v135 = vpop.xlane.xlu0 %134
    %v136 = vsel %vm63, %v52, 0.0
    %v137 = vadd.f32 %v51, %v136
    %138 = vadd.xlane.f32.xlu0 %v137
    %v139 = vpop.xlane.xlu0 %138
    %v140 = vsel %vm63, %v54, 0.0
    %v141 = vadd.f32 %v53, %v140
    %142 = vadd.xlane.f32.xlu0 %v141
    %v143 = vpop.xlane.xlu0 %142
    %v144 = vsel %vm63, %v56, 0.0
    %v145 = vadd.f32 %v55, %v144
    %146 = vadd.xlane.f32.xlu0 %v145
    %v147 = vpop.xlane.xlu0 %146
    %v148 = vsel %vm63, %v58, 0.0
    %v149 = vadd.f32 %v57, %v148
    %150 = vadd.xlane.f32.xlu0 %v149
    %v151 = vpop.xlane.xlu0 %150
    %v152 = vsel %vm63, %v60, 0.0
    %v153 = vadd.f32 %v59, %v152
    %154 = vadd.xlane.f32.xlu0 %v153
    %v155 = vpop.xlane.xlu0 %154
    %v156 = vsel %vm63, %v62, 0.0
    %v157 = vadd.f32 %v61, %v156
    %158 = vadd.xlane.f32.xlu0 %v157
    %v159 = vpop.xlane.xlu0 %158
    %v160 = vmul.f32 %v15, %v15
    %v161 = vmul.f32 %v16, %v16
    %v162 = vmul.f32 %v17, %v17
    %v163 = vmul.f32 %v18, %v18
    %v164 = vmul.f32 %v19, %v19
    %v165 = vmul.f32 %v20, %v20
    %v166 = vmul.f32 %v21, %v21
    %v167 = vmul.f32 %v22, %v22
    %v168 = vmul.f32 %v23, %v23
    %v169 = vmul.f32 %v24, %v24
    %v170 = vmul.f32 %v25, %v25
    %v171 = vmul.f32 %v26, %v26
    %v172 = vmul.f32 %v27, %v27
    %v173 = vmul.f32 %v28, %v28
    %v174 = vmul.f32 %v29, %v29
    %v175 = vmul.f32 %v30, %v30
    %v176 = vmul.f32 %v31, %v31
    %v177 = vmul.f32 %v32, %v32
    %v178 = vmul.f32 %v33, %v33
    %v179 = vmul.f32 %v34, %v34
    %v180 = vmul.f32 %v35, %v35
    %v181 = vmul.f32 %v36, %v36
    %v182 = vmul.f32 %v37, %v37
    %v183 = vmul.f32 %v38, %v38
    %v184 = vmul.f32 %v39, %v39
    %v185 = vmul.f32 %v40, %v40
    %v186 = vmul.f32 %v41, %v41
    %v187 = vmul.f32 %v42, %v42
    %v188 = vmul.f32 %v43, %v43
    %v189 = vmul.f32 %v44, %v44
    %v190 = vmul.f32 %v45, %v45
    %v191 = vmul.f32 %v46, %v46
    %v192 = vmul.f32 %v47, %v47
    %v193 = vmul.f32 %v48, %v48
    %v194 = vmul.f32 %v49, %v49
    %v195 = vmul.f32 %v50, %v50
    %v196 = vmul.f32 %v51, %v51
    %v197 = vmul.f32 %v52, %v52
    %v198 = vmul.f32 %v53, %v53
    %v199 = vmul.f32 %v54, %v54
    %v200 = vmul.f32 %v55, %v55
    %v201 = vmul.f32 %v56, %v56
    %v202 = vmul.f32 %v57, %v57
    %v203 = vmul.f32 %v58, %v58
    %v204 = vmul.f32 %v59, %v59
    %v205 = vmul.f32 %v60, %v60
    %v206 = vmul.f32 %v61, %v61
    %v207 = vmul.f32 %v62, %v62
    %v208 = vsel %vm63, %v161, 0.0
    %v209 = vadd.f32 %v160, %v208
    %210 = vadd.xlane.f32.xlu0 %v209
    %v211 = vpop.xlane.xlu0 %210
    %v212 = vsel %vm63, %v163, 0.0
    %v213 = vadd.f32 %v162, %v212
    %214 = vadd.xlane.f32.xlu0 %v213
    %v215 = vpop.xlane.xlu0 %214
    %v216 = vsel %vm63, %v165, 0.0
    %v217 = vadd.f32 %v164, %v216
    %218 = vadd.xlane.f32.xlu0 %v217
    %v219 = vpop.xlane.xlu0 %218
    %v220 = vsel %vm63, %v167, 0.0
    %v221 = vadd.f32 %v166, %v220
    %222 = vadd.xlane.f32.xlu0 %v221
    %v223 = vpop.xlane.xlu0 %222
    %v224 = vsel %vm63, %v169, 0.0
    %v225 = vadd.f32 %v168, %v224
    %226 = vadd.xlane.f32.xlu0 %v225
    %v227 = vpop.xlane.xlu0 %226
    %v228 = vsel %vm63, %v171, 0.0
    %v229 = vadd.f32 %v170, %v228
    %230 = vadd.xlane.f32.xlu0 %v229
    %v231 = vpop.xlane.xlu0 %230
    %v232 = vsel %vm63, %v173, 0.0
    %v233 = vadd.f32 %v172, %v232
    %234 = vadd.xlane.f32.xlu0 %v233
    %v235 = vpop.xlane.xlu0 %234
    %v236 = vsel %vm63, %v175, 0.0
    %v237 = vadd.f32 %v174, %v236
    %238 = vadd.xlane.f32.xlu0 %v237
    %v239 = vpop.xlane.xlu0 %238
    %v240 = vsel %vm63, %v177, 0.0
    %v241 = vadd.f32 %v176, %v240
    %242 = vadd.xlane.f32.xlu0 %v241
    %v243 = vpop.xlane.xlu0 %242
    %v244 = vsel %vm63, %v179, 0.0
    %v245 = vadd.f32 %v178, %v244
    %246 = vadd.xlane.f32.xlu0 %v245
    %v247 = vpop.xlane.xlu0 %246
    %v248 = vsel %vm63, %v181, 0.0
    %v249 = vadd.f32 %v180, %v248
    %250 = vadd.xlane.f32.xlu0 %v249
    %v251 = vpop.xlane.xlu0 %250
    %v252 = vsel %vm63, %v183, 0.0
    %v253 = vadd.f32 %v182, %v252
    %254 = vadd.xlane.f32.xlu0 %v253
    %v255 = vpop.xlane.xlu0 %254
    %v256 = vsel %vm63, %v185, 0.0
    %v257 = vadd.f32 %v184, %v256
    %258 = vadd.xlane.f32.xlu0 %v257
    %v259 = vpop.xlane.xlu0 %258
    %v260 = vsel %vm63, %v187, 0.0
    %v261 = vadd.f32 %v186, %v260
    %262 = vadd.xlane.f32.xlu0 %v261
    %v263 = vpop.xlane.xlu0 %262
    %v264 = vsel %vm63, %v189, 0.0
    %v265 = vadd.f32 %v188, %v264
    %266 = vadd.xlane.f32.xlu0 %v265
    %v267 = vpop.xlane.xlu0 %266
    %v268 = vsel %vm63, %v191, 0.0
    %v269 = vadd.f32 %v190, %v268
    %270 = vadd.xlane.f32.xlu0 %v269
    %v271 = vpop.xlane.xlu0 %270
    %v272 = vsel %vm63, %v193, 0.0
    %v273 = vadd.f32 %v192, %v272
    %274 = vadd.xlane.f32.xlu0 %v273
    %v275 = vpop.xlane.xlu0 %274
    %v276 = vsel %vm63, %v195, 0.0
    %v277 = vadd.f32 %v194, %v276
    %278 = vadd.xlane.f32.xlu0 %v277
    %v279 = vpop.xlane.xlu0 %278
    %v280 = vsel %vm63, %v197, 0.0
    %v281 = vadd.f32 %v196, %v280
    %282 = vadd.xlane.f32.xlu0 %v281
    %v283 = vpop.xlane.xlu0 %282
    %v284 = vsel %vm63, %v199, 0.0
    %v285 = vadd.f32 %v198, %v284
    %286 = vadd.xlane.f32.xlu0 %v285
    %v287 = vpop.xlane.xlu0 %286
    %v288 = vsel %vm63, %v201, 0.0
    %v289 = vadd.f32 %v200, %v288
    %290 = vadd.xlane.f32.xlu0 %v289
    %v291 = vpop.xlane.xlu0 %290
    %v292 = vsel %vm63, %v203, 0.0
    %v293 = vadd.f32 %v202, %v292
    %294 = vadd.xlane.f32.xlu0 %v293
    %v295 = vpop.xlane.xlu0 %294
    %v296 = vsel %vm63, %v205, 0.0
    %v297 = vadd.f32 %v204, %v296
    %298 = vadd.xlane.f32.xlu0 %v297
    %v299 = vpop.xlane.xlu0 %298
    %v300 = vsel %vm63, %v207, 0.0
    %v301 = vadd.f32 %v206, %v300
    %302 = vadd.xlane.f32.xlu0 %v301
    %v303 = vpop.xlane.xlu0 %302
    %v304 = vmul.f32 %v67, 0.0051020407
    %v305 = vmul.f32 %v71, 0.0051020407
    %v306 = vmul.f32 %v75, 0.0051020407
    %v307 = vmul.f32 %v79, 0.0051020407
    %v308 = vmul.f32 %v83, 0.0051020407
    %v309 = vmul.f32 %v87, 0.0051020407
    %v310 = vmul.f32 %v91, 0.0051020407
    %v311 = vmul.f32 %v95, 0.0051020407
    %v312 = vmul.f32 %v99, 0.0051020407
    %v313 = vmul.f32 %v103, 0.0051020407
    %v314 = vmul.f32 %v107, 0.0051020407
    %v315 = vmul.f32 %v111, 0.0051020407
    %v316 = vmul.f32 %v115, 0.0051020407
    %v317 = vmul.f32 %v119, 0.0051020407
    %v318 = vmul.f32 %v123, 0.0051020407
    %v319 = vmul.f32 %v127, 0.0051020407
    %v320 = vmul.f32 %v131, 0.0051020407
    %v321 = vmul.f32 %v135, 0.0051020407
    %v322 = vmul.f32 %v139, 0.0051020407
    %v323 = vmul.f32 %v143, 0.0051020407
    %v324 = vmul.f32 %v147, 0.0051020407
    %v325 = vmul.f32 %v151, 0.0051020407
    %v326 = vmul.f32 %v155, 0.0051020407
    %v327 = vmul.f32 %v159, 0.0051020407
    %v328 = vmul.f32 %v211, 0.0051020407
    %v329 = vmul.f32 %v215, 0.0051020407
    %v330 = vmul.f32 %v219, 0.0051020407
    %v331 = vmul.f32 %v223, 0.0051020407
    %v332 = vmul.f32 %v227, 0.0051020407
    %v333 = vmul.f32 %v231, 0.0051020407
    %v334 = vmul.f32 %v235, 0.0051020407
    %v335 = vmul.f32 %v239, 0.0051020407
    %v336 = vmul.f32 %v243, 0.0051020407
    %v337 = vmul.f32 %v247, 0.0051020407
    %v338 = vmul.f32 %v251, 0.0051020407
    %v339 = vmul.f32 %v255, 0.0051020407
    %v340 = vmul.f32 %v259, 0.0051020407
    %v341 = vmul.f32 %v263, 0.0051020407
    %v342 = vmul.f32 %v267, 0.0051020407
    %v343 = vmul.f32 %v271, 0.0051020407
    %v344 = vmul.f32 %v275, 0.0051020407
    %v345 = vmul.f32 %v279, 0.0051020407
    %v346 = vmul.f32 %v283, 0.0051020407
    %v347 = vmul.f32 %v287, 0.0051020407
    %v348 = vmul.f32 %v291, 0.0051020407
    %v349 = vmul.f32 %v295, 0.0051020407
    %v350 = vmul.f32 %v299, 0.0051020407
    %v351 = vmul.f32 %v303, 0.0051020407
    %v352 = vmul.f32 %v304, %v304
    %v353 = vmul.f32 %v305, %v305
    %v354 = vmul.f32 %v306, %v306
    %v355 = vmul.f32 %v307, %v307
    %v356 = vmul.f32 %v308, %v308
    %v357 = vmul.f32 %v309, %v309
    %v358 = vmul.f32 %v310, %v310
    %v359 = vmul.f32 %v311, %v311
    %v360 = vmul.f32 %v312, %v312
    %v361 = vmul.f32 %v313, %v313
    %v362 = vmul.f32 %v314, %v314
    %v363 = vmul.f32 %v315, %v315
    %v364 = vmul.f32 %v316, %v316
    %v365 = vmul.f32 %v317, %v317
    %v366 = vmul.f32 %v318, %v318
    %v367 = vmul.f32 %v319, %v319
    %v368 = vmul.f32 %v320, %v320
    %v369 = vmul.f32 %v321, %v321
    %v370 = vmul.f32 %v322, %v322
    %v371 = vmul.f32 %v323, %v323
    %v372 = vmul.f32 %v324, %v324
    %v373 = vmul.f32 %v325, %v325
    %v374 = vmul.f32 %v326, %v326
    %v375 = vmul.f32 %v327, %v327
    %v376 = vsub.f32 %v328, %v352
    %v377 = vsub.f32 %v329, %v353
    %v378 = vsub.f32 %v330, %v354
    %v379 = vsub.f32 %v331, %v355
    %v380 = vsub.f32 %v332, %v356
    %v381 = vsub.f32 %v333, %v357
    %v382 = vsub.f32 %v334, %v358
    %v383 = vsub.f32 %v335, %v359
    %v384 = vsub.f32 %v336, %v360
    %v385 = vsub.f32 %v337, %v361
    %v386 = vsub.f32 %v338, %v362
    %v387 = vsub.f32 %v339, %v363
    %v388 = vsub.f32 %v340, %v364
    %v389 = vsub.f32 %v341, %v365
    %v390 = vsub.f32 %v342, %v366
    %v391 = vsub.f32 %v343, %v367
    %v392 = vsub.f32 %v344, %v368
    %v393 = vsub.f32 %v345, %v369
    %v394 = vsub.f32 %v346, %v370
    %v395 = vsub.f32 %v347, %v371
    %v396 = vsub.f32 %v348, %v372
    %v397 = vsub.f32 %v349, %v373
    %v398 = vsub.f32 %v350, %v374
    %v399 = vsub.f32 %v351, %v375
    %v400 = vadd.f32 %v376, 1e-05
    %v401 = vadd.f32 %v377, 1e-05
    %v402 = vadd.f32 %v378, 1e-05
    %v403 = vadd.f32 %v379, 1e-05
    %v404 = vadd.f32 %v380, 1e-05
    %v405 = vadd.f32 %v381, 1e-05
    %v406 = vadd.f32 %v382, 1e-05
    %v407 = vadd.f32 %v383, 1e-05
    %v408 = vadd.f32 %v384, 1e-05
    %v409 = vadd.f32 %v385, 1e-05
    %v410 = vadd.f32 %v386, 1e-05
    %v411 = vadd.f32 %v387, 1e-05
    %v412 = vadd.f32 %v388, 1e-05
    %v413 = vadd.f32 %v389, 1e-05
    %v414 = vadd.f32 %v390, 1e-05
    %v415 = vadd.f32 %v391, 1e-05
    %v416 = vadd.f32 %v392, 1e-05
    %v417 = vadd.f32 %v393, 1e-05
    %v418 = vadd.f32 %v394, 1e-05
    %v419 = vadd.f32 %v395, 1e-05
    %v420 = vadd.f32 %v396, 1e-05
    %v421 = vadd.f32 %v397, 1e-05
    %v422 = vadd.f32 %v398, 1e-05
    %v423 = vadd.f32 %v399, 1e-05
    %v424 = vrsqrt.pop %v400
    %v425 = vrsqrt.pop %v401
    %v426 = vrsqrt.pop %v402
    %v427 = vrsqrt.pop %v403
    %v428 = vrsqrt.pop %v404
    %v429 = vrsqrt.pop %v405
    %v430 = vrsqrt.pop %v406
    %v431 = vrsqrt.pop %v407
    %v432 = vrsqrt.pop %v408
    %v433 = vrsqrt.pop %v409
    %v434 = vrsqrt.pop %v410
    %v435 = vrsqrt.pop %v411
    %v436 = vrsqrt.pop %v412
    %v437 = vrsqrt.pop %v413
    %v438 = vrsqrt.pop %v414
    %v439 = vrsqrt.pop %v415
    %v440 = vrsqrt.pop %v416
    %v441 = vrsqrt.pop %v417
    %v442 = vrsqrt.pop %v418
    %v443 = vrsqrt.pop %v419
    %v444 = vrsqrt.pop %v420
    %v445 = vrsqrt.pop %v421
    %v446 = vrsqrt.pop %v422
    %v447 = vrsqrt.pop %v423
    %v448 = vld [vmem:[%s1] sm:$0xff]
    %v449 = vld [vmem:[%s1 + $0x8] sm:$0xff]
    %v450 = vld [vmem:[%s1 + $0x10] sm:$0xff]
    %v451 = vld [vmem:[%s1 + $0x18] sm:$0xff]
    %v452 = vld [vmem:[%s1 + $0x20] sm:$0xff]
    %v453 = vld [vmem:[%s1 + $0x28] sm:$0xff]
    %v454 = vld [vmem:[%s1 + $0x30] sm:$0xff]
    %v455 = vld [vmem:[%s1 + $0x38] sm:$0xff]
    %v456 = vld [vmem:[%s1 + $0x40] sm:$0xff]
    %v457 = vld [vmem:[%s1 + $0x48] sm:$0xff]
    %v458 = vld [vmem:[%s1 + $0x50] sm:$0xff]
    %v459 = vld [vmem:[%s1 + $0x58] sm:$0xff]
    %v460 = vld [vmem:[%s1 + $0x60] sm:$0xff]
    %v461 = vld [vmem:[%s1 + $0x68] sm:$0xff]
    %v462 = vld [vmem:[%s1 + $0x70] sm:$0xff]
    %v463 = vld [vmem:[%s1 + $0x78] sm:$0xff]
    %v464 = vld [vmem:[%s1 + $0x80] sm:$0xff]
    %v465 = vld [vmem:[%s1 + $0x88] sm:$0xff]
    %v466 = vld [vmem:[%s1 + $0x90] sm:$0xff]
    %v467 = vld [vmem:[%s1 + $0x98] sm:$0xff]
    %v468 = vld [vmem:[%s1 + $0xa0] sm:$0xff]
    %v469 = vld [vmem:[%s1 + $0xa8] sm:$0xff]
    %v470 = vld [vmem:[%s1 + $0xb0] sm:$0xff]
    %v471 = vld [vmem:[%s1 + $0xb8] sm:$0xff]
    %v472 = vmul.f32 %v448, %v424
    %v473 = vmul.f32 %v449, %v425
    %v474 = vmul.f32 %v450, %v426
    %v475 = vmul.f32 %v451, %v427
    %v476 = vmul.f32 %v452, %v428
    %v477 = vmul.f32 %v453, %v429
    %v478 = vmul.f32 %v454, %v430
    %v479 = vmul.f32 %v455, %v431
    %v480 = vmul.f32 %v456, %v432
    %v481 = vmul.f32 %v457, %v433
    %v482 = vmul.f32 %v458, %v434
    %v483 = vmul.f32 %v459, %v435
    %v484 = vmul.f32 %v460, %v436
    %v485 = vmul.f32 %v461, %v437
    %v486 = vmul.f32 %v462, %v438
    %v487 = vmul.f32 %v463, %v439
    %v488 = vmul.f32 %v464, %v440
    %v489 = vmul.f32 %v465, %v441
    %v490 = vmul.f32 %v466, %v442
    %v491 = vmul.f32 %v467, %v443
    %v492 = vmul.f32 %v468, %v444
    %v493 = vmul.f32 %v469, %v445
    %v494 = vmul.f32 %v470, %v446
    %v495 = vmul.f32 %v471, %v447
    %v496 = vld [vmem:[%s2] sm:$0xff]
    %v497 = vld [vmem:[%s2 + $0x8] sm:$0xff]
    %v498 = vld [vmem:[%s2 + $0x10] sm:$0xff]
    %v499 = vld [vmem:[%s2 + $0x18] sm:$0xff]
    %v500 = vld [vmem:[%s2 + $0x20] sm:$0xff]
    %v501 = vld [vmem:[%s2 + $0x28] sm:$0xff]
    %v502 = vld [vmem:[%s2 + $0x30] sm:$0xff]
    %v503 = vld [vmem:[%s2 + $0x38] sm:$0xff]
    %v504 = vld [vmem:[%s2 + $0x40] sm:$0xff]
    %v505 = vld [vmem:[%s2 + $0x48] sm:$0xff]
    %v506 = vld [vmem:[%s2 + $0x50] sm:$0xff]
    %v507 = vld [vmem:[%s2 + $0x58] sm:$0xff]
    %v508 = vld [vmem:[%s2 + $0x60] sm:$0xff]
    %v509 = vld [vmem:[%s2 + $0x68] sm:$0xff]
    %v510 = vld [vmem:[%s2 + $0x70] sm:$0xff]
    %v511 = vld [vmem:[%s2 + $0x78] sm:$0xff]
    %v512 = vld [vmem:[%s2 + $0x80] sm:$0xff]
    %v513 = vld [vmem:[%s2 + $0x88] sm:$0xff]
    %v514 = vld [vmem:[%s2 + $0x90] sm:$0xff]
    %v515 = vld [vmem:[%s2 + $0x98] sm:$0xff]
    %v516 = vld [vmem:[%s2 + $0xa0] sm:$0xff]
    %v517 = vld [vmem:[%s2 + $0xa8] sm:$0xff]
    %v518 = vld [vmem:[%s2 + $0xb0] sm:$0xff]
    %v519 = vld [vmem:[%s2 + $0xb8] sm:$0xff]
    %v520 = vmul.f32 %v304, %v472
    %v521 = vmul.f32 %v305, %v473
    %v522 = vmul.f32 %v306, %v474
    %v523 = vmul.f32 %v307, %v475
    %v524 = vmul.f32 %v308, %v476
    %v525 = vmul.f32 %v309, %v477
    %v526 = vmul.f32 %v310, %v478
    %v527 = vmul.f32 %v311, %v479
    %v528 = vmul.f32 %v312, %v480
    %v529 = vmul.f32 %v313, %v481
    %v530 = vmul.f32 %v314, %v482
    %v531 = vmul.f32 %v315, %v483
    %v532 = vmul.f32 %v316, %v484
    %v533 = vmul.f32 %v317, %v485
    %v534 = vmul.f32 %v318, %v486
    %v535 = vmul.f32 %v319, %v487
    %v536 = vmul.f32 %v320, %v488
    %v537 = vmul.f32 %v321, %v489
    %v538 = vmul.f32 %v322, %v490
    %v539 = vmul.f32 %v323, %v491
    %v540 = vmul.f32 %v324, %v492
    %v541 = vmul.f32 %v325, %v493
    %v542 = vmul.f32 %v326, %v494
    %v543 = vmul.f32 %v327, %v495
    %v544 = vsub.f32 %v496, %v520
    %v545 = vsub.f32 %v497, %v521
    %v546 = vsub.f32 %v498, %v522
    %v547 = vsub.f32 %v499, %v523
    %v548 = vsub.f32 %v500, %v524
    %v549 = vsub.f32 %v501, %v525
    %v550 = vsub.f32 %v502, %v526
    %v551 = vsub.f32 %v503, %v527
    %v552 = vsub.f32 %v504, %v528
    %v553 = vsub.f32 %v505, %v529
    %v554 = vsub.f32 %v506, %v530
    %v555 = vsub.f32 %v507, %v531
    %v556 = vsub.f32 %v508, %v532
    %v557 = vsub.f32 %v509, %v533
    %v558 = vsub.f32 %v510, %v534
    %v559 = vsub.f32 %v511, %v535
    %v560 = vsub.f32 %v512, %v536
    %v561 = vsub.f32 %v513, %v537
    %v562 = vsub.f32 %v514, %v538
    %v563 = vsub.f32 %v515, %v539
    %v564 = vsub.f32 %v516, %v540
    %v565 = vsub.f32 %v517, %v541
    %v566 = vsub.f32 %v518, %v542
    %v567 = vsub.f32 %v519, %v543
    %569 = vset.pattern.permute.xlu0 0
    %570 = vperm.xlu0 %569, %v472
    %v571 = vpop.permute.xlu0 %570
    %574 = vset.pattern.permute.xlu0 0
    %575 = vperm.xlu0 %574, %v473
    %v576 = vpop.permute.xlu0 %575
    %579 = vset.pattern.permute.xlu0 0
    %580 = vperm.xlu0 %579, %v474
    %v581 = vpop.permute.xlu0 %580
    %584 = vset.pattern.permute.xlu0 0
    %585 = vperm.xlu0 %584, %v475
    %v586 = vpop.permute.xlu0 %585
    %589 = vset.pattern.permute.xlu0 0
    %590 = vperm.xlu0 %589, %v476
    %v591 = vpop.permute.xlu0 %590
    %594 = vset.pattern.permute.xlu0 0
    %595 = vperm.xlu0 %594, %v477
    %v596 = vpop.permute.xlu0 %595
    %599 = vset.pattern.permute.xlu0 0
    %600 = vperm.xlu0 %599, %v478
    %v601 = vpop.permute.xlu0 %600
    %604 = vset.pattern.permute.xlu0 0
    %605 = vperm.xlu0 %604, %v479
    %v606 = vpop.permute.xlu0 %605
    %609 = vset.pattern.permute.xlu0 0
    %610 = vperm.xlu0 %609, %v480
    %v611 = vpop.permute.xlu0 %610
    %614 = vset.pattern.permute.xlu0 0
    %615 = vperm.xlu0 %614, %v481
    %v616 = vpop.permute.xlu0 %615
    %619 = vset.pattern.permute.xlu0 0
    %620 = vperm.xlu0 %619, %v482
    %v621 = vpop.permute.xlu0 %620
    %624 = vset.pattern.permute.xlu0 0
    %625 = vperm.xlu0 %624, %v483
    %v626 = vpop.permute.xlu0 %625
    %629 = vset.pattern.permute.xlu0 0
    %630 = vperm.xlu0 %629, %v484
    %v631 = vpop.permute.xlu0 %630
    %634 = vset.pattern.permute.xlu0 0
    %635 = vperm.xlu0 %634, %v485
    %v636 = vpop.permute.xlu0 %635
    %639 = vset.pattern.permute.xlu0 0
    %640 = vperm.xlu0 %639, %v486
    %v641 = vpop.permute.xlu0 %640
    %644 = vset.pattern.permute.xlu0 0
    %645 = vperm.xlu0 %644, %v487
    %v646 = vpop.permute.xlu0 %645
    %649 = vset.pattern.permute.xlu0 0
    %650 = vperm.xlu0 %649, %v488
    %v651 = vpop.permute.xlu0 %650
    %654 = vset.pattern.permute.xlu0 0
    %655 = vperm.xlu0 %654, %v489
    %v656 = vpop.permute.xlu0 %655
    %659 = vset.pattern.permute.xlu0 0
    %660 = vperm.xlu0 %659, %v490
    %v661 = vpop.permute.xlu0 %660
    %664 = vset.pattern.permute.xlu0 0
    %665 = vperm.xlu0 %664, %v491
    %v666 = vpop.permute.xlu0 %665
    %669 = vset.pattern.permute.xlu0 0
    %670 = vperm.xlu0 %669, %v492
    %v671 = vpop.permute.xlu0 %670
    %674 = vset.pattern.permute.xlu0 0
    %675 = vperm.xlu0 %674, %v493
    %v676 = vpop.permute.xlu0 %675
    %679 = vset.pattern.permute.xlu0 0
    %680 = vperm.xlu0 %679, %v494
    %v681 = vpop.permute.xlu0 %680
    %684 = vset.pattern.permute.xlu0 0
    %685 = vperm.xlu0 %684, %v495
    %v686 = vpop.permute.xlu0 %685
    %v688 = vmul.f32 %v15, %v571
    %v689 = vmul.f32 %v16, %v571
    %v690 = vmul.f32 %v17, %v576
    %v691 = vmul.f32 %v18, %v576
    %v692 = vmul.f32 %v19, %v581
    %v693 = vmul.f32 %v20, %v581
    %v694 = vmul.f32 %v21, %v586
    %v695 = vmul.f32 %v22, %v586
    %v696 = vmul.f32 %v23, %v591
    %v697 = vmul.f32 %v24, %v591
    %v698 = vmul.f32 %v25, %v596
    %v699 = vmul.f32 %v26, %v596
    %v700 = vmul.f32 %v27, %v601
    %v701 = vmul.f32 %v28, %v601
    %v702 = vmul.f32 %v29, %v606
    %v703 = vmul.f32 %v30, %v606
    %v704 = vmul.f32 %v31, %v611
    %v705 = vmul.f32 %v32, %v611
    %v706 = vmul.f32 %v33, %v616
    %v707 = vmul.f32 %v34, %v616
    %v708 = vmul.f32 %v35, %v621
    %v709 = vmul.f32 %v36, %v621
    %v710 = vmul.f32 %v37, %v626
    %v711 = vmul.f32 %v38, %v626
    %v712 = vmul.f32 %v39, %v631
    %v713 = vmul.f32 %v40, %v631
    %v714 = vmul.f32 %v41, %v636
    %v715 = vmul.f32 %v42, %v636
    %v716 = vmul.f32 %v43, %v641
    %v717 = vmul.f32 %v44, %v641
    %v718 = vmul.f32 %v45, %v646
    %v719 = vmul.f32 %v46, %v646
    %v720 = vmul.f32 %v47, %v651
    %v721 = vmul.f32 %v48, %v651
    %v722 = vmul.f32 %v49, %v656
    %v723 = vmul.f32 %v50, %v656
    %v724 = vmul.f32 %v51, %v661
    %v725 = vmul.f32 %v52, %v661
    %v726 = vmul.f32 %v53, %v666
    %v727 = vmul.f32 %v54, %v666
    %v728 = vmul.f32 %v55, %v671
    %v729 = vmul.f32 %v56, %v671
    %v730 = vmul.f32 %v57, %v676
    %v731 = vmul.f32 %v58, %v676
    %v732 = vmul.f32 %v59, %v681
    %v733 = vmul.f32 %v60, %v681
    %v734 = vmul.f32 %v61, %v686
    %v735 = vmul.f32 %v62, %v686
    %737 = vset.pattern.permute.xlu0 0
    %738 = vperm.xlu0 %737, %v544
    %v739 = vpop.permute.xlu0 %738
    %742 = vset.pattern.permute.xlu0 0
    %743 = vperm.xlu0 %742, %v545
    %v744 = vpop.permute.xlu0 %743
    %747 = vset.pattern.permute.xlu0 0
    %748 = vperm.xlu0 %747, %v546
    %v749 = vpop.permute.xlu0 %748
    %752 = vset.pattern.permute.xlu0 0
    %753 = vperm.xlu0 %752, %v547
    %v754 = vpop.permute.xlu0 %753
    %757 = vset.pattern.permute.xlu0 0
    %758 = vperm.xlu0 %757, %v548
    %v759 = vpop.permute.xlu0 %758
    %762 = vset.pattern.permute.xlu0 0
    %763 = vperm.xlu0 %762, %v549
    %v764 = vpop.permute.xlu0 %763
    %767 = vset.pattern.permute.xlu0 0
    %768 = vperm.xlu0 %767, %v550
    %v769 = vpop.permute.xlu0 %768
    %772 = vset.pattern.permute.xlu0 0
    %773 = vperm.xlu0 %772, %v551
    %v774 = vpop.permute.xlu0 %773
    %777 = vset.pattern.permute.xlu0 0
    %778 = vperm.xlu0 %777, %v552
    %v779 = vpop.permute.xlu0 %778
    %782 = vset.pattern.permute.xlu0 0
    %783 = vperm.xlu0 %782, %v553
    %v784 = vpop.permute.xlu0 %783
    %787 = vset.pattern.permute.xlu0 0
    %788 = vperm.xlu0 %787, %v554
    %v789 = vpop.permute.xlu0 %788
    %792 = vset.pattern.permute.xlu0 0
    %793 = vperm.xlu0 %792, %v555
    %v794 = vpop.permute.xlu0 %793
    %797 = vset.pattern.permute.xlu0 0
    %798 = vperm.xlu0 %797, %v556
    %v799 = vpop.permute.xlu0 %798
    %802 = vset.pattern.permute.xlu0 0
    %803 = vperm.xlu0 %802, %v557
    %v804 = vpop.permute.xlu0 %803
    %807 = vset.pattern.permute.xlu0 0
    %808 = vperm.xlu0 %807, %v558
    %v809 = vpop.permute.xlu0 %808
    %812 = vset.pattern.permute.xlu0 0
    %813 = vperm.xlu0 %812, %v559
    %v814 = vpop.permute.xlu0 %813
    %817 = vset.pattern.permute.xlu0 0
    %818 = vperm.xlu0 %817, %v560
    %v819 = vpop.permute.xlu0 %818
    %822 = vset.pattern.permute.xlu0 0
    %823 = vperm.xlu0 %822, %v561
    %v824 = vpop.permute.xlu0 %823
    %827 = vset.pattern.permute.xlu0 0
    %828 = vperm.xlu0 %827, %v562
    %v829 = vpop.permute.xlu0 %828
    %832 = vset.pattern.permute.xlu0 0
    %833 = vperm.xlu0 %832, %v563
    %v834 = vpop.permute.xlu0 %833
    %837 = vset.pattern.permute.xlu0 0
    %838 = vperm.xlu0 %837, %v564
    %v839 = vpop.permute.xlu0 %838
    %842 = vset.pattern.permute.xlu0 0
    %843 = vperm.xlu0 %842, %v565
    %v844 = vpop.permute.xlu0 %843
    %847 = vset.pattern.permute.xlu0 0
    %848 = vperm.xlu0 %847, %v566
    %v849 = vpop.permute.xlu0 %848
    %852 = vset.pattern.permute.xlu0 0
    %853 = vperm.xlu0 %852, %v567
    %v854 = vpop.permute.xlu0 %853
    %v856 = vadd.f32 %v688, %v739
    %v857 = vadd.f32 %v689, %v739
    %v858 = vadd.f32 %v690, %v744
    %v859 = vadd.f32 %v691, %v744
    %v860 = vadd.f32 %v692, %v749
    %v861 = vadd.f32 %v693, %v749
    %v862 = vadd.f32 %v694, %v754
    %v863 = vadd.f32 %v695, %v754
    %v864 = vadd.f32 %v696, %v759
    %v865 = vadd.f32 %v697, %v759
    %v866 = vadd.f32 %v698, %v764
    %v867 = vadd.f32 %v699, %v764
    %v868 = vadd.f32 %v700, %v769
    %v869 = vadd.f32 %v701, %v769
    %v870 = vadd.f32 %v702, %v774
    %v871 = vadd.f32 %v703, %v774
    %v872 = vadd.f32 %v704, %v779
    %v873 = vadd.f32 %v705, %v779
    %v874 = vadd.f32 %v706, %v784
    %v875 = vadd.f32 %v707, %v784
    %v876 = vadd.f32 %v708, %v789
    %v877 = vadd.f32 %v709, %v789
    %v878 = vadd.f32 %v710, %v794
    %v879 = vadd.f32 %v711, %v794
    %v880 = vadd.f32 %v712, %v799
    %v881 = vadd.f32 %v713, %v799
    %v882 = vadd.f32 %v714, %v804
    %v883 = vadd.f32 %v715, %v804
    %v884 = vadd.f32 %v716, %v809
    %v885 = vadd.f32 %v717, %v809
    %v886 = vadd.f32 %v718, %v814
    %v887 = vadd.f32 %v719, %v814
    %v888 = vadd.f32 %v720, %v819
    %v889 = vadd.f32 %v721, %v819
    %v890 = vadd.f32 %v722, %v824
    %v891 = vadd.f32 %v723, %v824
    %v892 = vadd.f32 %v724, %v829
    %v893 = vadd.f32 %v725, %v829
    %v894 = vadd.f32 %v726, %v834
    %v895 = vadd.f32 %v727, %v834
    %v896 = vadd.f32 %v728, %v839
    %v897 = vadd.f32 %v729, %v839
    %v898 = vadd.f32 %v730, %v844
    %v899 = vadd.f32 %v731, %v844
    %v900 = vadd.f32 %v732, %v849
    %v901 = vadd.f32 %v733, %v849
    %v902 = vadd.f32 %v734, %v854
    %v903 = vadd.f32 %v735, %v854
    %v904 = vmax.f32 %v856, 0.0
    %v905 = vmax.f32 %v857, 0.0
    %v906 = vmax.f32 %v858, 0.0
    %v907 = vmax.f32 %v859, 0.0
    %v908 = vmax.f32 %v860, 0.0
    %v909 = vmax.f32 %v861, 0.0
    %v910 = vmax.f32 %v862, 0.0
    %v911 = vmax.f32 %v863, 0.0
    %v912 = vmax.f32 %v864, 0.0
    %v913 = vmax.f32 %v865, 0.0
    %v914 = vmax.f32 %v866, 0.0
    %v915 = vmax.f32 %v867, 0.0
    %v916 = vmax.f32 %v868, 0.0
    %v917 = vmax.f32 %v869, 0.0
    %v918 = vmax.f32 %v870, 0.0
    %v919 = vmax.f32 %v871, 0.0
    %v920 = vmax.f32 %v872, 0.0
    %v921 = vmax.f32 %v873, 0.0
    %v922 = vmax.f32 %v874, 0.0
    %v923 = vmax.f32 %v875, 0.0
    %v924 = vmax.f32 %v876, 0.0
    %v925 = vmax.f32 %v877, 0.0
    %v926 = vmax.f32 %v878, 0.0
    %v927 = vmax.f32 %v879, 0.0
    %v928 = vmax.f32 %v880, 0.0
    %v929 = vmax.f32 %v881, 0.0
    %v930 = vmax.f32 %v882, 0.0
    %v931 = vmax.f32 %v883, 0.0
    %v932 = vmax.f32 %v884, 0.0
    %v933 = vmax.f32 %v885, 0.0
    %v934 = vmax.f32 %v886, 0.0
    %v935 = vmax.f32 %v887, 0.0
    %v936 = vmax.f32 %v888, 0.0
    %v937 = vmax.f32 %v889, 0.0
    %v938 = vmax.f32 %v890, 0.0
    %v939 = vmax.f32 %v891, 0.0
    %v940 = vmax.f32 %v892, 0.0
    %v941 = vmax.f32 %v893, 0.0
    %v942 = vmax.f32 %v894, 0.0
    %v943 = vmax.f32 %v895, 0.0
    %v944 = vmax.f32 %v896, 0.0
    %v945 = vmax.f32 %v897, 0.0
    %v946 = vmax.f32 %v898, 0.0
    %v947 = vmax.f32 %v899, 0.0
    %v948 = vmax.f32 %v900, 0.0
    %v949 = vmax.f32 %v901, 0.0
    %v950 = vmax.f32 %v902, 0.0
    %v951 = vmax.f32 %v903, 0.0
    %952 = vst [vmem:[#allocation2] sm:$0xff] %v904
    %953 = vst.msk [vmem:[#allocation2 + $0x8] sm:$0xff] %vm63, %v905
    %954 = vst [vmem:[#allocation2 + $0x10] sm:$0xff] %v906
    %955 = vst.msk [vmem:[#allocation2 + $0x18] sm:$0xff] %vm63, %v907
    %956 = vst [vmem:[#allocation2 + $0x20] sm:$0xff] %v908
    %957 = vst.msk [vmem:[#allocation2 + $0x28] sm:$0xff] %vm63, %v909
    %958 = vst [vmem:[#allocation2 + $0x30] sm:$0xff] %v910
    %959 = vst.msk [vmem:[#allocation2 + $0x38] sm:$0xff] %vm63, %v911
    %960 = vst [vmem:[#allocation2 + $0x40] sm:$0xff] %v912
    %961 = vst.msk [vmem:[#allocation2 + $0x48] sm:$0xff] %vm63, %v913
    %962 = vst [vmem:[#allocation2 + $0x50] sm:$0xff] %v914
    %963 = vst.msk [vmem:[#allocation2 + $0x58] sm:$0xff] %vm63, %v915
    %964 = vst [vmem:[#allocation2 + $0x60] sm:$0xff] %v916
    %965 = vst.msk [vmem:[#allocation2 + $0x68] sm:$0xff] %vm63, %v917
    %966 = vst [vmem:[#allocation2 + $0x70] sm:$0xff] %v918
    %967 = vst.msk [vmem:[#allocation2 + $0x78] sm:$0xff] %vm63, %v919
    %968 = vst [vmem:[#allocation2 + $0x80] sm:$0xff] %v920
    %969 = vst.msk [vmem:[#allocation2 + $0x88] sm:$0xff] %vm63, %v921
    %970 = vst [vmem:[#allocation2 + $0x90] sm:$0xff] %v922
    %971 = vst.msk [vmem:[#allocation2 + $0x98] sm:$0xff] %vm63, %v923
    %972 = vst [vmem:[#allocation2 + $0xa0] sm:$0xff] %v924
    %973 = vst.msk [vmem:[#allocation2 + $0xa8] sm:$0xff] %vm63, %v925
    %974 = vst [vmem:[#allocation2 + $0xb0] sm:$0xff] %v926
    %975 = vst.msk [vmem:[#allocation2 + $0xb8] sm:$0xff] %vm63, %v927
    %976 = vst [vmem:[#allocation2 + $0xc0] sm:$0xff] %v928
    %977 = vst.msk [vmem:[#allocation2 + $0xc8] sm:$0xff] %vm63, %v929
    %978 = vst [vmem:[#allocation2 + $0xd0] sm:$0xff] %v930
    %979 = vst.msk [vmem:[#allocation2 + $0xd8] sm:$0xff] %vm63, %v931
    %980 = vst [vmem:[#allocation2 + $0xe0] sm:$0xff] %v932
    %981 = vst.msk [vmem:[#allocation2 + $0xe8] sm:$0xff] %vm63, %v933
    %982 = vst [vmem:[#allocation2 + $0xf0] sm:$0xff] %v934
    %983 = vst.msk [vmem:[#allocation2 + $0xf8] sm:$0xff] %vm63, %v935
    %984 = vst [vmem:[#allocation2 + $0x100] sm:$0xff] %v936
    %985 = vst.msk [vmem:[#allocation2 + $0x108] sm:$0xff] %vm63, %v937
    %986 = vst [vmem:[#allocation2 + $0x110] sm:$0xff] %v938
    %987 = vst.msk [vmem:[#allocation2 + $0x118] sm:$0xff] %vm63, %v939
    %988 = vst [vmem:[#allocation2 + $0x120] sm:$0xff] %v940
    %989 = vst.msk [vmem:[#allocation2 + $0x128] sm:$0xff] %vm63, %v941
    %990 = vst [vmem:[#allocation2 + $0x130] sm:$0xff] %v942
    %991 = vst.msk [vmem:[#allocation2 + $0x138] sm:$0xff] %vm63, %v943
    %992 = vst [vmem:[#allocation2 + $0x140] sm:$0xff] %v944
    %993 = vst.msk [vmem:[#allocation2 + $0x148] sm:$0xff] %vm63, %v945
    %994 = vst [vmem:[#allocation2 + $0x150] sm:$0xff] %v946
    %995 = vst.msk [vmem:[#allocation2 + $0x158] sm:$0xff] %vm63, %v947
    %996 = vst [vmem:[#allocation2 + $0x160] sm:$0xff] %v948
    %997 = vst.msk [vmem:[#allocation2 + $0x168] sm:$0xff] %vm63, %v949
    %998 = vst [vmem:[#allocation2 + $0x170] sm:$0xff] %v950
    %999 = vst.msk [vmem:[#allocation2 + $0x178] sm:$0xff] %vm63, %v951
    // Predicated region
    $region14: #{tpu_custom_call.1} parent=1 // pred_check
      _
    $region15: #{tpu_custom_call.1} parent=1 // pred_check_branch
      %1001 = sbr.rel (0) target = $region17
    $region16: #{tpu_custom_call.1} parent=1 // pred_region
      %s1003 = ssub.s32 6144, 6144
      %1004 = vsyncadd [#allocation3], %s1003
      %s1005 = sshll.u32 [#allocation2], 4
      %s1006 = int_to_ptr.vmem [resolvable:$true] %s1005
      %1011 = dma.vmem_to_hbm [thread:$0]  %s1006, 6144, %s3, [#allocation3], 256, 256, 16
    $region17: #{tpu_custom_call.1} parent=1 // pred_fallthru
      _
    // Predicated region
    $region18: #{tpu_custom_call.1} parent=1 // pred_check
      _
    $region19: #{tpu_custom_call.1} parent=1 // pred_check_branch
      %1013 = sbr.rel (0) target = $region21
    $region20: #{tpu_custom_call.1} parent=1 // pred_region
      %1014 = dma.done [#allocation3], 6144
    $region21: #{tpu_custom_call.1} parent=1 // pred_fallthru
      _
    %1015 = vsyncpa [#allocation3], 1

</llo_original>
